<compile_context>
chip_gen: v6e
topology: v6e:2x2x1
jax: 0.10.0
libtpu: 0.0.40
codegen_flags: <defaults>
</compile_context>

<pallas_src>
import functools

import jax
import jax.numpy as jnp
from jax.experimental import pallas as pl
from jax.experimental.pallas import tpu as pltpu


def _wce_kernel(x_ref, t_ref, *rest, num_classes, power, total, hw, tile,
                has_weight):
    if has_weight:
        w_ref, out_ref, acc_ref = rest
    else:
        out_ref, acc_ref = rest
        w_ref = None

    b = pl.program_id(0)          # batch index
    i = pl.program_id(1)          # pixel-tile index

    @pl.when(jnp.logical_and(b == 0, i == 0))
    def _():
        acc_ref[...] = jnp.zeros_like(acc_ref)

    x = x_ref[...].astype(jnp.float32)                          # (C, T)

    # log-softmax pieces over the channel (sublane) axis.
    m = jnp.max(x, axis=0, keepdims=True)                       # (1, T)
    z = x - m
    lse = jnp.log(jnp.sum(jnp.exp(z), axis=0, keepdims=True))   # (1, T)

    # logit of the target class via one-hot select + channel reduce.
    t = jnp.clip(t_ref[...].astype(jnp.int32), 0, num_classes - 1)   # (1, T)
    cls = jax.lax.broadcasted_iota(jnp.int32, x.shape, 0)             # (C, T)
    sel = jnp.sum(jnp.where(cls == t, x, 0.0), axis=0, keepdims=True)  # (1, T)

    # sum_c(log_p * onehot) = x[target] - m - lse  (log_p never materialized)
    logpy = sel - m - lse                                        # (1, T)

    if has_weight:
        wt = w_ref[...].astype(jnp.float32)                      # (1, T)
        logpy = logpy * (wt ** power)

    # ragged last tile: zero lanes past the per-image pixel count.
    pix = i * tile + jax.lax.broadcasted_iota(jnp.int32, logpy.shape, 1)
    logpy = jnp.where(pix < hw, logpy, 0.0)

    acc_ref[...] += logpy

    @pl.when(jnp.logical_and(b == pl.num_programs(0) - 1,
                             i == pl.num_programs(1) - 1))
    def _():
        s = jnp.sum(acc_ref[...], keepdims=True)                 # (1, 1)
        out_ref[...] = -(s / jnp.float32(total))


def weighted_cross_entropy_2d(inp, target, weight=None, power=2,
                              max_tile=8192):
    """inp: (N, C, H, W); target: (N, Ht, Wt) int; weight: (N, Ht, Wt) or None."""
    n, c, h, w = inp.shape

    # --- crop target / weight (plain-JAX glue; no-op when shapes match) ---
    def crop(t):
        _, ht, wt = t.shape
        off_w, off_h = (wt - w) // 2, (ht - h) // 2
        if off_w > 0 and off_h > 0:
            t = t[:, off_h:ht - off_h, off_w:wt - off_w]
        return t

    target = crop(target)
    if weight is not None:
        weight = crop(weight)

    hw = h * w
    total = n * hw                       # mean denominator

    # --- layout: free, contiguous reshapes (no HBM transpose, no pad) ---
    x = inp.reshape(n, c, hw)            # native dtype; cast to f32 in-kernel
    t = target.reshape(n, 1, hw)
    if t.dtype != jnp.int32:
        t = t.astype(jnp.int32)

    # --- lane tile: multiple of 128, as large as comfortably fits VMEM ---
    tile = min(max_tile, ((hw + 127) // 128) * 128)
    itemsize = jnp.dtype(x.dtype).itemsize
    vmem_budget = 16 * 1024 * 1024       # conservative; fits v5e/v6e/v7x scoped limits
    per_lane = 2 * (c * itemsize + 8)    # double-buffered logits + target + weight
    cap = max(128, (vmem_budget // per_lane) // 128 * 128)
    tile = min(tile, cap)
    num_tiles = pl.cdiv(hw, tile)

    has_weight = weight is not None

    kernel = functools.partial(
        _wce_kernel, num_classes=c, power=power, total=total, hw=hw, tile=tile,
        has_weight=has_weight)

    # None in block_shape squeezes the batch dim out of the kernel-visible ref.
    in_specs = [
        pl.BlockSpec((None, c, tile), lambda b, i: (b, 0, i)),
        pl.BlockSpec((None, 1, tile), lambda b, i: (b, 0, i)),
    ]
    args = [x, t]
    if has_weight:
        args.append(weight.reshape(n, 1, hw))
        in_specs.append(pl.BlockSpec((None, 1, tile), lambda b, i: (b, 0, i)))

    out = pl.pallas_call(
        kernel,
        out_shape=jax.ShapeDtypeStruct((1, 1), jnp.float32),
        grid_spec=pltpu.PrefetchScalarGridSpec(
            num_scalar_prefetch=0,
            grid=(n, num_tiles),
            in_specs=in_specs,
            out_specs=pl.BlockSpec((1, 1), lambda b, i: (0, 0)),
            scratch_shapes=[pltpu.VMEM((1, tile), jnp.float32)],
        ),
        compiler_params=pltpu.CompilerParams(
            dimension_semantics=("arbitrary", "arbitrary")),
    )(*args)
    return out[0, 0]


def _reference(inp, target, weight, power=2):
    # pure-JAX reference for sanity check
    n, c, h, w = inp.shape
    log_p = jax.nn.log_softmax(inp.astype(jnp.float32), axis=1)
    t = jnp.clip(target, 0, c - 1)
    ymask = jax.nn.one_hot(t, c, axis=1, dtype=jnp.float32)     # (N, C, H, W)
    if weight is not None:
        ymask = ymask * (weight.astype(jnp.float32) ** power)[:, None, :, :]
    logpy = (log_p * ymask).sum(1)
    return -logpy.mean()


if __name__ == "__main__":
    key = jax.random.PRNGKey(0)
    k1, k2, k3 = jax.random.split(key, 3)

    N, C, H, W = 2, 4, 16, 16
    x = jax.random.normal(k1, (N, C, H, W), dtype=jnp.float32)
    target = jax.random.randint(k2, (N, H, W), 0, C, dtype=jnp.int32)
    weight = jax.random.uniform(k3, (N, H, W), dtype=jnp.float32)

    # weighted path
    loss = jax.block_until_ready(
        weighted_cross_entropy_2d(x, target, weight, power=2))
    ref = _reference(x, target, weight, power=2)
    assert jnp.allclose(loss, ref, rtol=1e-5, atol=1e-5), (loss, ref)

    # weight=None path (specialized kernel, no ones tensor DMA)
    loss_nw = jax.block_until_ready(weighted_cross_entropy_2d(x, target, None))
    ref_nw = _reference(x, target, None)
    assert jnp.allclose(loss_nw, ref_nw, rtol=1e-5, atol=1e-5), (loss_nw, ref_nw)

    # native bf16 logits path (cast to f32 happens inside the kernel)
    x_bf16 = x.astype(jnp.bfloat16)
    loss_bf = jax.block_until_ready(
        weighted_cross_entropy_2d(x_bf16, target, weight, power=2))
    ref_bf = _reference(x_bf16.astype(jnp.float32), target, weight, power=2)
    assert jnp.allclose(loss_bf, ref_bf, rtol=1e-4, atol=1e-4), (loss_bf, ref_bf)

    print("KERNEL_OK")
</pallas_src>

<mosaic_0001>
module attributes {stable_mosaic.version = 11 : i64} {
  func.func @_wce_kernel(%arg0: i32, %arg1: i32, %arg2: memref<1x4x256xf32, #tpu.memory_space<vmem>>, %arg3: memref<1x1x256xi32, #tpu.memory_space<vmem>>, %arg4: memref<1x1x256xf32, #tpu.memory_space<vmem>>, %arg5: memref<1x1xf32, #tpu.memory_space<vmem>>, %arg6: memref<1x256xf32, #tpu.memory_space<vmem>>) attributes {dimension_semantics = [#tpu.dimension_semantics<arbitrary>, #tpu.dimension_semantics<arbitrary>], iteration_bounds = array<i64: 2, 1>, scalar_prefetch = 0 : i64, scratch_operands = 1 : i64, tpu.core_type = #tpu.core_type<tc>, window_params = [{transform_indices = @transform_0, window_bounds = array<i64: 1, 4, 256>}, {transform_indices = @transform_1, window_bounds = array<i64: 1, 1, 256>}, {transform_indices = @transform_2, window_bounds = array<i64: 1, 1, 256>}, {pipeline_mode = #tpu.pipeline_mode<synchronous>, transform_indices = @transform_3, window_bounds = array<i64: 1, 1>}]} {
    %c0_i32 = arith.constant 0 : i32
    %0 = arith.cmpi eq, %arg0, %c0_i32 : i32
    %c0_i32_0 = arith.constant 0 : i32
    %1 = arith.cmpi eq, %arg1, %c0_i32_0 : i32
    %2 = arith.andi %0, %1 : i1
    %3 = arith.extui %2 : i1 to i32
    %c0_i32_1 = arith.constant 0 : i32
    %4 = arith.cmpi ne, %3, %c0_i32_1 : i32
    scf.if %4 {
      %cst_22 = arith.constant 0.000000e+00 : f32
      %50 = vector.broadcast %cst_22 : f32 to vector<1x256xf32>
      %c0_23 = arith.constant 0 : index
      %c0_24 = arith.constant 0 : index
      %51 = vector.load %arg6[%c0_23, %c0_24] : memref<1x256xf32, #tpu.memory_space<vmem>>, vector<1x256xf32>
      tpu.vector_store %arg6[%c0_23, %c0_24], %50 {strides = array<i32>} : memref<1x256xf32, #tpu.memory_space<vmem>>, vector<1x256xf32>,
    } else {
    }
    %c0 = arith.constant 0 : index
    %c0_2 = arith.constant 0 : index
    %c0_3 = arith.constant 0 : index
    %5 = vector.load %arg2[%c0, %c0_2, %c0_3] : memref<1x4x256xf32, #tpu.memory_space<vmem>>, vector<1x4x256xf32>
    %6 = vector.shape_cast %5 : vector<1x4x256xf32> to vector<4x256xf32>
    %cst = arith.constant dense<0xFF800000> : vector<256xf32>
    %7 = vector.multi_reduction <maximumf>, %6, %cst [0] : vector<4x256xf32> to vector<256xf32>
    %8 = vector.shape_cast %7 : vector<256xf32> to vector<1x256xf32>
    %9 = vector.broadcast %8 : vector<1x256xf32> to vector<4x256xf32>
    %10 = arith.subf %6, %9 : vector<4x256xf32>
    %11 = math.exp %10 : vector<4x256xf32>
    %cst_4 = arith.constant dense<0.000000e+00> : vector<256xf32>
    %12 = vector.multi_reduction <add>, %11, %cst_4 [0] : vector<4x256xf32> to vector<256xf32>
    %13 = vector.shape_cast %12 : vector<256xf32> to vector<1x256xf32>
    %14 = math.log %13 : vector<1x256xf32>
    %c0_5 = arith.constant 0 : index
    %c0_6 = arith.constant 0 : index
    %c0_7 = arith.constant 0 : index
    %15 = vector.load %arg3[%c0_5, %c0_6, %c0_7] : memref<1x1x256xi32, #tpu.memory_space<vmem>>, vector<1x1x256xi32>
    %16 = vector.shape_cast %15 : vector<1x1x256xi32> to vector<1x256xi32>
    %c0_i32_8 = arith.constant 0 : i32
    %c3_i32 = arith.constant 3 : i32
    %17 = vector.broadcast %c0_i32_8 : i32 to vector<1x256xi32>
    %18 = arith.maxsi %17, %16 : vector<1x256xi32>
    %19 = vector.broadcast %c3_i32 : i32 to vector<1x256xi32>
    %20 = arith.minsi %19, %18 : vector<1x256xi32>
    %21 = tpu.iota {dimensions = array<i32: 0>} : vector<4x256xi32>
    %22 = vector.broadcast %20 : vector<1x256xi32> to vector<4x256xi32>
    %23 = arith.cmpi eq, %21, %22 : vector<4x256xi32>
    %cst_9 = arith.constant 0.000000e+00 : f32
    %24 = vector.broadcast %cst_9 : f32 to vector<4x256xf32>
    %25 = arith.select %23, %6, %24 : vector<4x256xi1>, vector<4x256xf32>
    %cst_10 = arith.constant dense<0.000000e+00> : vector<256xf32>
    %26 = vector.multi_reduction <add>, %25, %cst_10 [0] : vector<4x256xf32> to vector<256xf32>
    %27 = vector.shape_cast %26 : vector<256xf32> to vector<1x256xf32>
    %28 = arith.subf %27, %8 : vector<1x256xf32>
    %29 = arith.subf %28, %14 : vector<1x256xf32>
    %c0_11 = arith.constant 0 : index
    %c0_12 = arith.constant 0 : index
    %c0_13 = arith.constant 0 : index
    %30 = vector.load %arg4[%c0_11, %c0_12, %c0_13] : memref<1x1x256xf32, #tpu.memory_space<vmem>>, vector<1x1x256xf32>
    %31 = vector.shape_cast %30 : vector<1x1x256xf32> to vector<1x256xf32>
    %32 = arith.mulf %31, %31 : vector<1x256xf32>
    %33 = arith.mulf %29, %32 : vector<1x256xf32>
    %c256_i32 = arith.constant 256 : i32
    %34 = arith.muli %arg1, %c256_i32 : i32
    %35 = tpu.iota {dimensions = array<i32: 1>} : vector<1x256xi32>
    %36 = vector.broadcast %34 : i32 to vector<1x256xi32>
    %37 = arith.addi %36, %35 : vector<1x256xi32>
    %c256_i32_14 = arith.constant 256 : i32
    %38 = vector.broadcast %c256_i32_14 : i32 to vector<1x256xi32>
    %39 = arith.cmpi slt, %37, %38 : vector<1x256xi32>
    %cst_15 = arith.constant 0.000000e+00 : f32
    %40 = vector.broadcast %cst_15 : f32 to vector<1x256xf32>
    %41 = arith.select %39, %33, %40 : vector<1x256xi1>, vector<1x256xf32>
    %c0_16 = arith.constant 0 : index
    %c0_17 = arith.constant 0 : index
    %42 = vector.load %arg6[%c0_16, %c0_17] : memref<1x256xf32, #tpu.memory_space<vmem>>, vector<1x256xf32>
    %43 = arith.addf %42, %41 : vector<1x256xf32>
    %c0_18 = arith.constant 0 : index
    %c0_19 = arith.constant 0 : index
    %44 = vector.load %arg6[%c0_18, %c0_19] : memref<1x256xf32, #tpu.memory_space<vmem>>, vector<1x256xf32>
    tpu.vector_store %arg6[%c0_18, %c0_19], %43 {strides = array<i32>} : memref<1x256xf32, #tpu.memory_space<vmem>>, vector<1x256xf32>,
    %c1_i32 = arith.constant 1 : i32
    %45 = arith.cmpi eq, %arg0, %c1_i32 : i32
    %c0_i32_20 = arith.constant 0 : i32
    %46 = arith.cmpi eq, %arg1, %c0_i32_20 : i32
    %47 = arith.andi %45, %46 : i1
    %48 = arith.extui %47 : i1 to i32
    %c0_i32_21 = arith.constant 0 : i32
    %49 = arith.cmpi ne, %48, %c0_i32_21 : i32
    scf.if %49 {
      %c0_22 = arith.constant 0 : index
      %c0_23 = arith.constant 0 : index
      %50 = vector.load %arg6[%c0_22, %c0_23] : memref<1x256xf32, #tpu.memory_space<vmem>>, vector<1x256xf32>
      %51 = vector.shape_cast %50 : vector<1x256xf32> to vector<1x1x256xf32>
      %cst_24 = arith.constant dense<0.000000e+00> : vector<1xf32>
      %52 = vector.multi_reduction <add>, %51, %cst_24 [1, 2] : vector<1x1x256xf32> to vector<1xf32>
      %53 = vector.shape_cast %52 : vector<1xf32> to vector<1x1x1xf32>
      %54 = vector.extract %53[0, 0, 0] : f32 from vector<1x1x1xf32>
      %55 = vector.broadcast %54 : f32 to vector<1x1xf32>
      %cst_25 = arith.constant 5.120000e+02 : f32
      %56 = vector.broadcast %cst_25 : f32 to vector<1x1xf32>
      %57 = arith.divf %55, %56 : vector<1x1xf32>
      %cst_26 = arith.constant 0.000000e+00 : f32
      %58 = vector.broadcast %cst_26 : f32 to vector<1x1xf32>
      %59 = arith.subf %58, %57 : vector<1x1xf32>
      %c0_27 = arith.constant 0 : index
      %c0_28 = arith.constant 0 : index
      %60 = vector.load %arg5[%c0_27, %c0_28] : memref<1x1xf32, #tpu.memory_space<vmem>>, vector<1x1xf32>
      tpu.vector_store %arg5[%c0_27, %c0_28], %59 {strides = array<i32>} : memref<1x1xf32, #tpu.memory_space<vmem>>, vector<1x1xf32>,
    } else {
    }
    return
  }
  func.func @transform_0(%arg0: i32, %arg1: i32) -> (i32, i32, i32) {
    %c0_i32 = arith.constant 0 : i32
    %c0_i32_0 = arith.constant 0 : i32
    return %arg0, %c0_i32, %arg1 : i32, i32, i32
  }
  func.func @transform_1(%arg0: i32, %arg1: i32) -> (i32, i32, i32) {
    %c0_i32 = arith.constant 0 : i32
    %c0_i32_0 = arith.constant 0 : i32
    return %arg0, %c0_i32, %arg1 : i32, i32, i32
  }
  func.func @transform_2(%arg0: i32, %arg1: i32) -> (i32, i32, i32) {
    %c0_i32 = arith.constant 0 : i32
    %c0_i32_0 = arith.constant 0 : i32
    return %arg0, %c0_i32, %arg1 : i32, i32, i32
  }
  func.func @transform_3(%arg0: i32, %arg1: i32) -> (i32, i32) {
    %c0_i32 = arith.constant 0 : i32
    %c0_i32_0 = arith.constant 0 : i32
    %c0_i32_1 = arith.constant 0 : i32
    return %c0_i32, %c0_i32_0 : i32, i32
  }
}

</mosaic_0001>

<llo_original>
// kernel: tpu_custom_call.1
$region0: #{tpu_custom_call.1}
  #allocation0 [shape = 'u32[]', space=smem, size = 0x4, offset = 0x4, fixed_abs, tag = 'smem constant byte address 0x4 - core index']
  #allocation1 [shape = 'u32[144,128]{1,0:T(1,128)}', space=vmem, size = 0x12000, scoped, tag = 'internal scratch']
  #allocation2 [shape = 'f32[1,256]{1,0:T(1,128)}', space=vmem, size = 0x400, scoped, tag = 'scratch operand']
  %s0 = inlined_call_operand.hbm [shape: f32[2,4,256], index: 0, kind: input, shape index: {}]
  %s1 = inlined_call_operand.hbm [shape: s32[2,1,256], index: 1, kind: input, shape index: {}]
  %s2 = inlined_call_operand.hbm [shape: f32[2,1,256], index: 2, kind: input, shape index: {}]
  %s3 = inlined_call_operand.hbm [shape: f32[1,1], index: 3, kind: output, shape index: {}]
  %s4 = sld [smem:[#allocation0]]
  $region65: #{tpu_custom_call.1} parent=0
    _
  %s6 = ssub.s32 1, %s4
  %s7 = scalar_select 0, %s6, %s4
  $region1: #{tpu_custom_call.1} parent=0
    #allocation3 [shape = 'u8[8192]{0}', space=vmem, size = 0x2000, scoped, tag = 'input window, operand 0']
    #allocation4 [shape = 's32[2]{0}', space=sflag, size = 0x8, scoped, tag = 'scoped memory for tpu_custom_call.1']
    #allocation5 [shape = 's32[2]{0}', space=sflag, size = 0x8, scoped, tag = 'scoped memory for tpu_custom_call.1']
    #allocation6 [shape = 'u8[2048]{0}', space=vmem, size = 0x800, scoped, tag = 'input window, operand 1']
    #allocation7 [shape = 's32[2]{0}', space=sflag, size = 0x8, scoped, tag = 'scoped memory for tpu_custom_call.1']
    #allocation8 [shape = 'u8[2048]{0}', space=vmem, size = 0x800, scoped, tag = 'input window, operand 2']
    #allocation9 [shape = 'u8[512]{0}', space=vmem, size = 0x400, scoped, tag = 'output window, operand 0, single buffered']
    %8 = vsyncpa [#allocation4], 0
    %s9 = scalar_lea.sflag [#allocation4], 1
    %10 = vsyncpa %s9, 0
    %11 = vsyncpa [#allocation7], 0
    %s12 = scalar_lea.sflag [#allocation7], 1
    %13 = vsyncpa %s12, 0
    %14 = vsyncpa [#allocation5], 0
    loop: start=0, step=1, limit=4
    $region2: #{tpu_custom_call.1} parent=1 // loop_pre_header
      _
    $region3: #{tpu_custom_call.1} parent=1 // loop_header
      %s16 = sphi 0, %s20
      %p17 = scmp.ge.s32.totalorder %s16, 4
      %s23 = sphi 0, %s35
      %s24 = sphi 0, %s31
      %s25 = sphi 0, %s23
      %s26 = sphi 0, %s24
      %s27 = sphi 0, %s25
      %s28 = sphi 0, %s26
      %s40 = sphi 0, %s42
      %s43 = sphi 0, %s40
      %s44 = sphi 0, %s43
      %s60 = sphi 0, %s44
      %s68 = sphi 0, %s70
      %s71 = sphi 0, %s68
      %s72 = sphi 0, %s71
      %s88 = sphi 0, %s72
      %s96 = sphi 0, %s98
      %s99 = sphi 0, %s96
      %s100 = sphi 0, %s99
      %s116 = sphi 0, %s100
      %s120 = sphi 0, %s120
      %s122 = sphi 0, %s120
      %s123 = sphi 0, %s122
      %s137 = sphi 0, %s123
    $region4: #{tpu_custom_call.1} parent=1 // loop_header_branch
      %19 = sbr.rel (%p17) target = $region8
    $region5: #{tpu_custom_call.1} parent=1 // loop_body
      %s21 = ssub.s32 %s16, 1
      %s22 = ssub.s32 %s16, 2
      %s29 = sadd.s32 1, %s24
      %p30 = scmp.ge.s32.totalorder %s29, 1
      %s31 = scalar_select %p30, 0, %s29
      %s32 = sadd.s32 1, %s23
      %s33 = scalar_select %p30, %s32, %s23
      %p34 = scmp.ge.s32.totalorder %s33, 2
      %s35 = scalar_select %p34, 0, %s33
      %s36 = ssub.s32 %s23, %s35
      %s37 = ssub.s32 %s24, %s31
      %s38 = sor.u32 %s36, %s37
      %p39 = scmp.eq.s32.totalorder %s38, 0
      %s41 = sadd.s32 %s40, 1
      %s42 = scalar_select %p39, %s40, %s41
      %p45 = pneg %p39
      %p46 = scmp.eq.s32.totalorder %s16, 1
      %p47 = por %p45, %p46
      %p48 = scmp.ne.s32.totalorder %s40, %s43
      %p49 = scmp.eq.s32.totalorder %s16, 0
      %p50 = por %p48, %p49
      %p51 = scmp.ne.s32.totalorder %s40, %s43
      %p52 = scmp.eq.s32.totalorder %s21, 1
      %p53 = por %p51, %p52
      %p54 = scmp.ne.s32.totalorder %s43, %s44
      %p55 = scmp.eq.s32.totalorder %s21, 0
      %p56 = por %p54, %p55
      %p57 = scmp.ne.s32.totalorder %s43, %s44
      %p58 = scmp.eq.s32.totalorder %s22, 1
      %p59 = por %p57, %p58
      %p61 = scmp.ne.s32.totalorder %s44, %s60
      %p62 = scmp.eq.s32.totalorder %s22, 0
      %p63 = por %p61, %p62
      %s64 = ssub.s32 %s23, %s35
      %s65 = ssub.s32 %s24, %s31
      %s66 = sor.u32 %s64, %s65
      %p67 = scmp.eq.s32.totalorder %s66, 0
      %s69 = sadd.s32 %s68, 1
      %s70 = scalar_select %p67, %s68, %s69
      %p73 = pneg %p67
      %p74 = scmp.eq.s32.totalorder %s16, 1
      %p75 = por %p73, %p74
      %p76 = scmp.ne.s32.totalorder %s68, %s71
      %p77 = scmp.eq.s32.totalorder %s16, 0
      %p78 = por %p76, %p77
      %p79 = scmp.ne.s32.totalorder %s68, %s71
      %p80 = scmp.eq.s32.totalorder %s21, 1
      %p81 = por %p79, %p80
      %p82 = scmp.ne.s32.totalorder %s71, %s72
      %p83 = scmp.eq.s32.totalorder %s21, 0
      %p84 = por %p82, %p83
      %p85 = scmp.ne.s32.totalorder %s71, %s72
      %p86 = scmp.eq.s32.totalorder %s22, 1
      %p87 = por %p85, %p86
      %p89 = scmp.ne.s32.totalorder %s72, %s88
      %p90 = scmp.eq.s32.totalorder %s22, 0
      %p91 = por %p89, %p90
      %s92 = ssub.s32 %s23, %s35
      %s93 = ssub.s32 %s24, %s31
      %s94 = sor.u32 %s92, %s93
      %p95 = scmp.eq.s32.totalorder %s94, 0
      %s97 = sadd.s32 %s96, 1
      %s98 = scalar_select %p95, %s96, %s97
      %p101 = pneg %p95
      %p102 = scmp.eq.s32.totalorder %s16, 1
      %p103 = por %p101, %p102
      %p104 = scmp.ne.s32.totalorder %s96, %s99
      %p105 = scmp.eq.s32.totalorder %s16, 0
      %p106 = por %p104, %p105
      %p107 = scmp.ne.s32.totalorder %s96, %s99
      %p108 = scmp.eq.s32.totalorder %s21, 1
      %p109 = por %p107, %p108
      %p110 = scmp.ne.s32.totalorder %s99, %s100
      %p111 = scmp.eq.s32.totalorder %s21, 0
      %p112 = por %p110, %p111
      %p113 = scmp.ne.s32.totalorder %s99, %s100
      %p114 = scmp.eq.s32.totalorder %s22, 1
      %p115 = por %p113, %p114
      %p117 = scmp.ne.s32.totalorder %s100, %s116
      %p118 = scmp.eq.s32.totalorder %s22, 0
      %p119 = por %p117, %p118
      %s121 = sadd.s32 %s120, 1
      %p124 = scmp.eq.s32.totalorder %s16, 1
      %p125 = scmp.ne.s32.totalorder %s120, %s122
      %p126 = scmp.eq.s32.totalorder %s16, 0
      %p127 = por %p125, %p126
      %p128 = scmp.ne.s32.totalorder %s120, %s122
      %p129 = scmp.eq.s32.totalorder %s21, 1
      %p130 = por %p128, %p129
      %p131 = scmp.ne.s32.totalorder %s122, %s123
      %p132 = scmp.eq.s32.totalorder %s21, 0
      %p133 = por %p131, %p132
      %p134 = scmp.ne.s32.totalorder %s122, %s123
      %p135 = scmp.eq.s32.totalorder %s22, 1
      %p136 = por %p134, %p135
      %p138 = scmp.ne.s32.totalorder %s123, %s137
      %p139 = scmp.eq.s32.totalorder %s22, 0
      %p140 = por %p138, %p139
      %p141 = scmp.le.s32.totalorder 1, %s16
      %p142 = scmp.lt.s32.totalorder %s16, 3
      %p143 = pnand %p141, %p142
      %p144 = pneg %p143
      // Predicated region
      $region9: #{tpu_custom_call.1} parent=5 // pred_check
        _
      $region10: #{tpu_custom_call.1} parent=5 // pred_check_branch
        %146 = sbr.rel (%p143) target = $region12
      $region11: #{tpu_custom_call.1} parent=5 // pred_region
        %s147 = ssub.s32 %s16, 1
      $region12: #{tpu_custom_call.1} parent=5 // pred_fallthru
        _
      %p148 = scmp.lt.s32.totalorder %s16, 2
      // Predicated region
      $region13: #{tpu_custom_call.1} parent=5 // pred_check
        %p149 = pneg %p148
      $region14: #{tpu_custom_call.1} parent=5 // pred_check_branch
        %151 = sbr.rel (%p149) target = $region16
      $region15: #{tpu_custom_call.1} parent=5 // pred_region
        // Predicated region
        $region17: #{tpu_custom_call.1} parent=15 // pred_check
          %p152 = pneg %p50
        $region18: #{tpu_custom_call.1} parent=15 // pred_check_branch
          %154 = sbr.rel (%p152) target = $region20
        $region19: #{tpu_custom_call.1} parent=15 // pred_region
          %s155 = sand.u32 %s40, 1
          %s156 = scalar_lea.sflag [#allocation4], %s155
          %s157 = sand.u32 %s40, 1
          %s158 = smul.addr %s157, 8
          %s159 = scalar_lea.vmem [#allocation3], %s158
          %s160 = smul.u32 2, %s24
          %s162 = ssub.s32 128, 128
          %163 = vsyncadd %s156, %s162
          %s164 = smul.addr %s23, 2
          %s165 = sadd.s32 %s160, %s164
          %s166 = smul.addr %s165, 64
          %s167 = scalar_lea.hbm %s0, %s166
          %s169 = sshll.u32 %s159, 4
          %s170 = int_to_ptr.vmem [resolvable:$true] %s169
          %172 = dma.hbm_to_vmem [thread:$0]  %s167, 128, %s170, %s156
        $region20: #{tpu_custom_call.1} parent=15 // pred_fallthru
          _
        // Predicated region
        $region21: #{tpu_custom_call.1} parent=15 // pred_check
          %p173 = pneg %p78
        $region22: #{tpu_custom_call.1} parent=15 // pred_check_branch
          %175 = sbr.rel (%p173) target = $region24
        $region23: #{tpu_custom_call.1} parent=15 // pred_region
          %s176 = sand.u32 %s16, 1
          %s177 = scalar_lea.sflag [#allocation7], %s176
          %s178 = sand.u32 %s68, 1
          %s179 = smul.addr %s178, 2
          %s180 = scalar_lea.vmem [#allocation6], %s179
          %s181 = smul.u32 2, %s24
          %s183 = ssub.s32 32, 32
          %184 = vsyncadd %s177, %s183
          %s185 = smul.addr %s23, 2
          %s186 = sadd.s32 %s181, %s185
          %s187 = smul.addr %s186, 16
          %s188 = scalar_lea.hbm %s1, %s187
          %s190 = sshll.u32 %s180, 4
          %s191 = int_to_ptr.vmem [resolvable:$true] %s190
          %193 = dma.hbm_to_vmem [thread:$0]  %s188, 32, %s191, %s177
        $region24: #{tpu_custom_call.1} parent=15 // pred_fallthru
          _
        // Predicated region
        $region25: #{tpu_custom_call.1} parent=15 // pred_check
          %p194 = pneg %p106
        $region26: #{tpu_custom_call.1} parent=15 // pred_check_branch
          %196 = sbr.rel (%p194) target = $region28
        $region27: #{tpu_custom_call.1} parent=15 // pred_region
          %s197 = sand.u32 %s16, 1
          %s198 = scalar_lea.sflag [#allocation7], %s197
          %s199 = sand.u32 %s96, 1
          %s200 = smul.addr %s199, 2
          %s201 = scalar_lea.vmem [#allocation8], %s200
          %s202 = smul.u32 2, %s24
          %s204 = ssub.s32 32, 32
          %205 = vsyncadd %s198, %s204
          %s206 = smul.addr %s23, 2
          %s207 = sadd.s32 %s202, %s206
          %s208 = smul.addr %s207, 16
          %s209 = scalar_lea.hbm %s2, %s208
          %s211 = sshll.u32 %s201, 4
          %s212 = int_to_ptr.vmem [resolvable:$true] %s211
          %214 = dma.hbm_to_vmem [thread:$0]  %s209, 32, %s212, %s198
        $region28: #{tpu_custom_call.1} parent=15 // pred_fallthru
          _
      $region16: #{tpu_custom_call.1} parent=5 // pred_fallthru
        _
      %p215 = scmp.le.s32.totalorder 1, %s16
      %p216 = scmp.lt.s32.totalorder %s16, 3
      %p217 = pnand %p215, %p216
      %p218 = pneg %p217
      // Predicated region
      $region29: #{tpu_custom_call.1} parent=5 // pred_check
        _
      $region30: #{tpu_custom_call.1} parent=5 // pred_check_branch
        %220 = sbr.rel (%p217) target = $region32
      $region31: #{tpu_custom_call.1} parent=5 // pred_region
        %s221 = ssub.s32 %s16, 1
        %s222 = sand.u32 %s43, 1
        %s223 = scalar_lea.sflag [#allocation4], %s222
        %s224 = sand.u32 %s43, 1
        %s225 = smul.addr %s224, 8
        %s226 = scalar_lea.vmem [#allocation3], %s225
        // Predicated region
        $region33: #{tpu_custom_call.1} parent=31 // pred_check
          %p227 = pneg %p56
        $region34: #{tpu_custom_call.1} parent=31 // pred_check_branch
          %229 = sbr.rel (%p227) target = $region36
        $region35: #{tpu_custom_call.1} parent=31 // pred_region
          %230 = dma.done %s223, 128
        $region36: #{tpu_custom_call.1} parent=31 // pred_fallthru
          _
        %s231 = sand.u32 %s21, 1
        %s232 = scalar_lea.sflag [#allocation7], %s231
        %s233 = sand.u32 %s71, 1
        %s234 = smul.addr %s233, 2
        %s235 = scalar_lea.vmem [#allocation6], %s234
        // Predicated region
        $region37: #{tpu_custom_call.1} parent=31 // pred_check
          %p236 = pneg %p84
        $region38: #{tpu_custom_call.1} parent=31 // pred_check_branch
          %238 = sbr.rel (%p236) target = $region40
        $region39: #{tpu_custom_call.1} parent=31 // pred_region
          %239 = dma.done %s232, 32
        $region40: #{tpu_custom_call.1} parent=31 // pred_fallthru
          _
        %s240 = sand.u32 %s21, 1
        %s241 = scalar_lea.sflag [#allocation7], %s240
        %s242 = sand.u32 %s99, 1
        %s243 = smul.addr %s242, 2
        %s244 = scalar_lea.vmem [#allocation8], %s243
        // Predicated region
        $region41: #{tpu_custom_call.1} parent=31 // pred_check
          %p245 = pneg %p112
        $region42: #{tpu_custom_call.1} parent=31 // pred_check_branch
          %247 = sbr.rel (%p245) target = $region44
        $region43: #{tpu_custom_call.1} parent=31 // pred_region
          %248 = dma.done %s241, 32
        $region44: #{tpu_custom_call.1} parent=31 // pred_fallthru
          _
        %s249 = sand.u32 %s43, 1
        %s250 = scalar_lea.sflag [#allocation4], %s249
        %s251 = sand.u32 %s43, 1
        %s252 = smul.addr %s251, 8
        %s253 = scalar_lea.vmem [#allocation3], %s252
        %p254 = pneg %p56
        %p255 = pneg %p53
        %s256 = sand.u32 %s21, 1
        %s257 = scalar_lea.sflag [#allocation7], %s256
        %s258 = sand.u32 %s71, 1
        %s259 = smul.addr %s258, 2
        %s260 = scalar_lea.vmem [#allocation6], %s259
        %p261 = pneg %p84
        %p262 = pneg %p81
        %s263 = sand.u32 %s21, 1
        %s264 = scalar_lea.sflag [#allocation7], %s263
        %s265 = sand.u32 %s99, 1
        %s266 = smul.addr %s265, 2
        %s267 = scalar_lea.vmem [#allocation8], %s266
        %p268 = pneg %p112
        %p269 = pneg %p109
        %p270 = pneg %p133
        %p271 = pneg %p130
        %s272 = smul.u32 2, %s26
        %s273 = smul.u32 2, %s26
        %s274 = smul.u32 2, %s26
        %p275 = scmp.eq.s32.totalorder %s25, 0
        %p276 = scmp.eq.s32.totalorder %s26, 0
        %p277 = pnand %p275, %p276
        %p278 = pneg %p277
        // Predicated region
        $region45: #{tpu_custom_call.1} parent=31 // pred_check
          _
        $region46: #{tpu_custom_call.1} parent=31 // pred_check_branch
          %280 = sbr.rel (%p277) target = $region48
        $region47: #{tpu_custom_call.1} parent=31 // pred_region
          %v281 = vlaneseq
          %vm282 = vcmp.ge.s32.totalorder %v281, 0
          %vm283 = vcmp.lt.s32.totalorder %v281, 256
          %vm284 = vmand %vm282, %vm283
          %285 = vst.msk [vmem:[#allocation2] sm:$0x3] %vm284, 0.0
        $region48: #{tpu_custom_call.1} parent=31 // pred_fallthru
          _
        %v286 = vld [vmem:[%s226] sm:$0xff]
        %v288 = vcombine.high %v286, %v286
        %vm290 = vcmask 1043456
        %v291 = vsel %vm290, %v286, -inf
        %v292 = vrot.slane %v291, 4
        %v293 = vmax.f32 %v291, %v292
        %v294 = vrot.slane %v293, 2
        %v295 = vmax.f32 %v293, %v294
        %v296 = vrot.slane %v295, 1
        %v297 = vmax.f32 %v295, %v296
        %v298 = vsel %vm290, %v288, -inf
        %v299 = vrot.slane %v298, 4
        %v300 = vmax.f32 %v298, %v299
        %v301 = vrot.slane %v300, 2
        %v302 = vmax.f32 %v300, %v301
        %v303 = vrot.slane %v302, 1
        %v304 = vmax.f32 %v302, %v303
        %v307 = vcombine.low %v297, %v304
        %v309 = vsub.f32 %v286, %v307
        %v310 = vmul.f32 %v309, 1.442695
        %v311 = vpow.pop %v310
        %v313 = vcombine.high %v311, %v311
        %v315 = vsel %vm290, %v311, 0.0
        %v316 = vrot.slane %v315, 4
        %v317 = vadd.f32 %v315, %v316
        %v318 = vrot.slane %v317, 2
        %v319 = vadd.f32 %v317, %v318
        %v320 = vrot.slane %v319, 1
        %v321 = vadd.f32 %v319, %v320
        %v322 = vsel %vm290, %v313, 0.0
        %v323 = vrot.slane %v322, 4
        %v324 = vadd.f32 %v322, %v323
        %v325 = vrot.slane %v324, 2
        %v326 = vadd.f32 %v324, %v325
        %v327 = vrot.slane %v326, 1
        %v328 = vadd.f32 %v326, %v327
        %v329 = vlog2.pop %v321
        %v330 = vmul.f32 %v329, 0.6931472
        %v331 = vlog2.pop %v328
        %v332 = vmul.f32 %v331, 0.6931472
        %v333 = vld [vmem:[%s235] sm:$0x3]
        %vm334 = vcmp.gt.s32.totalorder %v333, 0
        %v335 = vsel %vm334, %v333, 0
        %vm336 = vcmp.lt.s32.totalorder %v335, 3
        %v337 = vsel %vm336, %v335, 3
        %v338 = vlaneseq
        %v339 = vshrl.u32 %v338, 7
        %v340 = vlaneseq
        %v341 = vshrl.u32 %v340, 7
        %v342 = vsub.s32 0, %v341
        %v343 = vrot.slane %v337, %v342
        %v344 = vlaneseq
        %v345 = vshrl.u32 %v344, 7
        %v346 = vsub.s32 1, %v345
        %v347 = vrot.slane %v337, %v346
        %vm348 = vcmp.eq.s32.totalorder %v339, %v343
        %vm349 = vcmp.eq.s32.totalorder %v339, %v347
        %v350 = vsel %vm348, %v286, 0.0
        %v351 = vsel %vm349, %v288, 0.0
        %v352 = vsel %vm290, %v350, 0.0
        %v353 = vrot.slane %v352, 4
        %v354 = vadd.f32 %v352, %v353
        %v355 = vrot.slane %v354, 2
        %v356 = vadd.f32 %v354, %v355
        %v357 = vrot.slane %v356, 1
        %v358 = vadd.f32 %v356, %v357
        %v359 = vsel %vm290, %v351, 0.0
        %v360 = vrot.slane %v359, 4
        %v361 = vadd.f32 %v359, %v360
        %v362 = vrot.slane %v361, 2
        %v363 = vadd.f32 %v361, %v362
        %v364 = vrot.slane %v363, 1
        %v365 = vadd.f32 %v363, %v364
        %v366 = vsub.f32 %v358, %v297
        %v367 = vsub.f32 %v365, %v304
        %v368 = vsub.f32 %v366, %v330
        %v369 = vsub.f32 %v367, %v332
        %v370 = vld [vmem:[%s244] sm:$0x3]
        %v371 = vmul.f32 %v370, %v370
        %v373 = vlaneseq
        %v374 = vshrl.u32 %v373, 7
        %v375 = vsub.s32 0, %v374
        %v376 = vrot.slane %v371, %v375
        %v377 = vlaneseq
        %v378 = vshrl.u32 %v377, 7
        %v379 = vsub.s32 1, %v378
        %v380 = vrot.slane %v371, %v379
        %v383 = vmul.f32 %v368, %v376
        %v384 = vmul.f32 %v369, %v380
        %s385 = smul.u32 %s26, 256
        %v386 = vlaneseq
        %v387 = vand.u32 %v386, 127
        %v388 = vadd.s32 %v387, 128
        %v389 = vstv %s385
        %v390 = vadd.s32 %v389, %v387
        %v391 = vadd.s32 %v389, %v388
        %vm392 = vcmp.lt.s32.totalorder %v390, 256
        %vm393 = vcmp.lt.s32.totalorder %v391, 256
        %v394 = vsel %vm392, %v383, 0.0
        %v395 = vsel %vm393, %v384, 0.0
        %v396 = vld [vmem:[#allocation2] sm:$0x3]
        %v399 = vcombine.low %v394, %v395
        %v401 = vunpack.c.l.s4 1966171168
        %v402 = vunpack.c.0.s8 %v401
        %v403 = vlaneseq
        %v404 = vshrl.u32 %v403, 7
        %v405 = vsub.s32 %v402, %v404
        %v406 = vrot.slane %v399, %v405
        %v408 = vunpack.c.l.s4 1966171168
        %v409 = vunpack.c.0.s8 %v408
        %v410 = vlaneseq
        %v411 = vshrl.u32 %v410, 7
        %v412 = vsub.s32 %v409, %v411
        %v413 = vrot.slane %v406, %v412
        %v415 = vadd.f32 %v396, %v413
        %v416 = vlaneseq
        %vm417 = vcmp.ge.s32.totalorder %v416, 0
        %vm418 = vcmp.lt.s32.totalorder %v416, 256
        %vm419 = vmand %vm417, %vm418
        %420 = vst.msk [vmem:[#allocation2] sm:$0x3] %vm419, %v415
        %p421 = scmp.eq.s32.totalorder %s25, 1
        %p422 = pnand %p421, %p276
        %p423 = pneg %p422
        // Predicated region
        $region49: #{tpu_custom_call.1} parent=31 // pred_check
          _
        $region50: #{tpu_custom_call.1} parent=31 // pred_check_branch
          %425 = sbr.rel (%p422) target = $region52
        $region51: #{tpu_custom_call.1} parent=31 // pred_region
          %v426 = vld [vmem:[#allocation2] sm:$0x3]
          %v428 = vlaneseq
          %v429 = vshrl.u32 %v428, 7
          %v430 = vsub.s32 0, %v429
          %v431 = vrot.slane %v426, %v430
          %v432 = vlaneseq
          %v433 = vshrl.u32 %v432, 7
          %v434 = vsub.s32 1, %v433
          %v435 = vrot.slane %v426, %v434
          %vm438 = vcmask 1040384
          %v439 = vsel %vm438, %v431, 0.0
          %v440 = vsel %vm438, %v435, 0.0
          %v441 = vadd.f32 %v439, %v440
          %442 = vadd.xlane.f32.xlu0 %v441
          %v443 = vpop.xlane.xlu0 %442
          %v444 = vrot.slane %v443, 4
          %v445 = vadd.f32 %v443, %v444
          %v446 = vrot.slane %v445, 2
          %v447 = vadd.f32 %v445, %v446
          %v448 = vrot.slane %v447, 1
          %v449 = vadd.f32 %v447, %v448
          %s450 = vtos %v449
          %v451 = vstv %s450
          %v452 = vrcp.pop 512.0
          %v453 = vmul.f32 %v451, %v452
          %v454 = vsub.f32 0.0, %v453
          %vm455 = vcmask 0
          %456 = vst.msk [vmem:[#allocation9] sm:$0x1] %vm455, %v454
        $region52: #{tpu_custom_call.1} parent=31 // pred_fallthru
          _
        // Predicated region
        $region53: #{tpu_custom_call.1} parent=31 // pred_check
          %p457 = pneg %p130
        $region54: #{tpu_custom_call.1} parent=31 // pred_check_branch
          %459 = sbr.rel (%p457) target = $region56
        $region55: #{tpu_custom_call.1} parent=31 // pred_region
          %s461 = ssub.s32 16, 16
          %462 = vsyncadd [#allocation5], %s461
          %s464 = sshll.u32 [#allocation9], 4
          %s465 = int_to_ptr.vmem [resolvable:$true] %s464
          %467 = dma.vmem_to_hbm [thread:$0]  %s465, 16, %s3, [#allocation5]
        $region56: #{tpu_custom_call.1} parent=31 // pred_fallthru
          _
        // Predicated region
        $region57: #{tpu_custom_call.1} parent=31 // pred_check
          %p468 = pneg %p130
        $region58: #{tpu_custom_call.1} parent=31 // pred_check_branch
          %470 = sbr.rel (%p468) target = $region60
        $region59: #{tpu_custom_call.1} parent=31 // pred_region
          %471 = dma.done [#allocation5], 16
        $region60: #{tpu_custom_call.1} parent=31 // pred_fallthru
          _
      $region32: #{tpu_custom_call.1} parent=5 // pred_fallthru
        _
      %p472 = scmp.le.s32.totalorder 2, %s16
      // Predicated region
      $region61: #{tpu_custom_call.1} parent=5 // pred_check
        %p473 = pneg %p472
      $region62: #{tpu_custom_call.1} parent=5 // pred_check_branch
        %475 = sbr.rel (%p473) target = $region64
      $region63: #{tpu_custom_call.1} parent=5 // pred_region
        %s476 = ssub.s32 %s16, 2
      $region64: #{tpu_custom_call.1} parent=5 // pred_fallthru
        _
    $region6: #{tpu_custom_call.1} parent=1 // loop_footer
      %s20 = sadd.s32 1, %s16
    $region7: #{tpu_custom_call.1} parent=1 // loop_footer_branch
      %15 = sbr.rel target = $region3
    $region8: #{tpu_custom_call.1} parent=1 // loop_exit
      _
    %477 = vsyncpa [#allocation4], 1
    %s478 = scalar_lea.sflag [#allocation4], 1
    %479 = vsyncpa %s478, 1
    %480 = vsyncpa [#allocation7], 1
    %s481 = scalar_lea.sflag [#allocation7], 1
    %482 = vsyncpa %s481, 1
    %483 = vsyncpa [#allocation5], 1
    %s484 = scalar_lea.sflag [#allocation5], 1
    %485 = vsyncpa %s484, 1

</llo_original>
